<compile_context>
chip_gen: v6e
topology: v6e:2x2x1
jax: 0.10.0
libtpu: 0.0.40
codegen_flags: <defaults>
</compile_context>

<pallas_src>
import jax
import jax.numpy as jnp
from jax.experimental import pallas as pl
from jax.experimental.pallas import tpu as pltpu

FLAT = 128 * 64  # 8192, the fixed inner dimension of the view


def _view_copy_kernel(x_ref, o_ref):
    # Identity copy of the current (row_tile, 8192) block.
    o_ref[...] = x_ref[...]


def _sublane_multiple(dtype) -> int:
    # Second-to-last block dim must respect sub-32-bit sublane packing:
    # f32 -> 8, bf16 -> 16, int8/fp8 -> 32.
    itemsize = jnp.dtype(dtype).itemsize
    return max(8, 32 // max(itemsize, 1))


def view_forward(x, *, target_block_bytes=4 * 1024 * 1024):
    """Equivalent of `x.view(-1, 128*64)`; the copy is a Pallas kernel."""
    total = 1
    for d in x.shape:
        total *= d
    assert total % FLAT == 0, (
        f"total elements {total} not divisible by {FLAT}; view(-1, 8192) invalid"
    )
    m = total // FLAT

    # Glue: row-major flatten (matches torch .view on a contiguous NCHW tensor).
    x2d = jnp.reshape(x, (m, FLAT))

    itemsize = jnp.dtype(x.dtype).itemsize
    sub = _sublane_multiple(x.dtype)
    # Rows per block so one block is ~target_block_bytes, rounded down to the
    # sublane-packing multiple (but at least one packed group).
    rows = (target_block_bytes // (FLAT * itemsize)) // sub * sub
    rows = max(rows, sub)

    if rows >= m:
        # Full-extent first dim is always a legal block shape, even if m < 8.
        row_tile = m
        grid = (1,)
    else:
        row_tile = rows
        grid = (pl.cdiv(m, row_tile),)  # partial last block is masked by Pallas

    out = pl.pallas_call(
        _view_copy_kernel,
        out_shape=jax.ShapeDtypeStruct((m, FLAT), x.dtype),
        grid_spec=pltpu.PrefetchScalarGridSpec(
            num_scalar_prefetch=0,
            grid=grid,
            # Row tiles: contiguous, full 8192-lane width (64 x 128 lanes).
            in_specs=[pl.BlockSpec((row_tile, FLAT), lambda i: (i, 0))],
            out_specs=pl.BlockSpec((row_tile, FLAT), lambda i: (i, 0)),
        ),
        compiler_params=pltpu.CompilerParams(
            dimension_semantics=("parallel",),
            # Explicit VMEM budget: 2 bufs x (in + out) x ~4 MiB block ~= 16 MiB.
            vmem_limit_bytes=32 * 1024 * 1024,
        ),
        # Alias output onto the (reshaped) input buffer: no second HBM slab.
        input_output_aliases={0: 0},
    )(x2d)
    return out


if __name__ == "__main__":
    key = jax.random.PRNGKey(0)

    # Small NCHW input whose total element count is a multiple of 128*64:
    # (2, 128, 8, 8) -> 2 * 128 * 8 * 8 = 16384 = 2 * 8192  => output (2, 8192)
    x = jax.random.normal(key, (2, 128, 8, 8), dtype=jnp.float32)
    ref = jnp.reshape(x, (-1, FLAT))

    out = view_forward(x)
    out = jax.block_until_ready(out)

    assert out.shape == (2, FLAT), out.shape
    assert out.dtype == x.dtype
    assert bool(jnp.all(out == ref))

    # Second check: exercise multi-step row tiling (grid > 1) with a small
    # block-byte target so we stay at a tiny test size.
    x2 = jax.random.normal(jax.random.PRNGKey(1), (32, 128, 8, 8),
                           dtype=jnp.float32)  # m = 32
    ref2 = jnp.reshape(x2, (-1, FLAT))
    out2 = view_forward(x2, target_block_bytes=256 * 1024)  # row_tile=8, grid=(4,)
    out2 = jax.block_until_ready(out2)
    assert out2.shape == (32, FLAT), out2.shape
    assert bool(jnp.all(out2 == ref2))

    print("KERNEL_OK")
</pallas_src>

<mosaic_0001>
module attributes {stable_mosaic.version = 11 : i64} {
  func.func @_view_copy_kernel(%arg0: i32, %arg1: memref<2x8192xf32, #tpu.memory_space<vmem>>, %arg2: memref<2x8192xf32, #tpu.memory_space<vmem>>) attributes {dimension_semantics = [#tpu.dimension_semantics<parallel>], iteration_bounds = array<i64: 1>, scalar_prefetch = 0 : i64, scratch_operands = 0 : i64, tpu.core_type = #tpu.core_type<tc>, window_params = [{transform_indices = @transform_0, window_bounds = array<i64: 2, 8192>}, {transform_indices = @transform_1, window_bounds = array<i64: 2, 8192>}]} {
    %c0 = arith.constant 0 : index
    %c0_0 = arith.constant 0 : index
    %0 = vector.load %arg1[%c0, %c0_0] : memref<2x8192xf32, #tpu.memory_space<vmem>>, vector<2x8192xf32>
    %c0_1 = arith.constant 0 : index
    %c0_2 = arith.constant 0 : index
    %1 = vector.load %arg2[%c0_1, %c0_2] : memref<2x8192xf32, #tpu.memory_space<vmem>>, vector<2x8192xf32>
    tpu.vector_store %arg2[%c0_1, %c0_2], %0 {strides = array<i32>} : memref<2x8192xf32, #tpu.memory_space<vmem>>, vector<2x8192xf32>,
    return
  }
  func.func @transform_0(%arg0: i32) -> (i32, i32) {
    %c0_i32 = arith.constant 0 : i32
    %c0_i32_0 = arith.constant 0 : i32
    return %arg0, %c0_i32 : i32, i32
  }
  func.func @transform_1(%arg0: i32) -> (i32, i32) {
    %c0_i32 = arith.constant 0 : i32
    %c0_i32_0 = arith.constant 0 : i32
    return %arg0, %c0_i32 : i32, i32
  }
}

</mosaic_0001>

<llo_original>
// kernel: tpu_custom_call.1
$region0: #{tpu_custom_call.1}
  #allocation0 [shape = 'u32[]', space=smem, size = 0x4, offset = 0x4, fixed_abs, tag = 'smem constant byte address 0x4 - core index']
  #allocation1 [shape = 'u32[144,128]{1,0:T(1,128)}', space=vmem, size = 0x12000, scoped, tag = 'internal scratch']
  %s0 = inlined_call_operand.hbm [shape: f32[2,8192], index: 0, kind: input, shape index: {}, may-alias: {0,1}]
  %s1 = inlined_call_operand.hbm [shape: f32[2,8192], index: 1, kind: output, shape index: {}, may-alias: {0,1}]
  %s2 = sld [smem:[#allocation0]]
  $region18: #{tpu_custom_call.1} parent=0
    _
  %s4 = ssub.s32 1, %s2
  %s5 = scalar_select 0, %s4, %s2
  $region1: #{tpu_custom_call.1} parent=0
    #allocation2 [shape = 'u8[65536]{0}', space=vmem, size = 0x10000, scoped, tag = 'input window, operand 0, single buffered']
    #allocation3 [shape = 's32[1]{0}', space=sflag, size = 0x4, scoped, tag = 'scoped memory for tpu_custom_call.1']
    #allocation4 [shape = 's32[1]{0}', space=sflag, size = 0x4, scoped, tag = 'scoped memory for tpu_custom_call.1']
    #allocation5 [shape = 'u8[65536]{0}', space=vmem, size = 0x10000, scoped, tag = 'output window, operand 0, single buffered']
    %6 = vsyncpa [#allocation3], 0
    %7 = vsyncpa [#allocation4], 0
    // Predicated region
    $region2: #{tpu_custom_call.1} parent=1 // pred_check
      _
    $region3: #{tpu_custom_call.1} parent=1 // pred_check_branch
      %9 = sbr.rel (0) target = $region5
    $region4: #{tpu_custom_call.1} parent=1 // pred_region
      %s11 = ssub.s32 2048, 2048
      %12 = vsyncadd [#allocation3], %s11
      %s14 = sshll.u32 [#allocation2], 4
      %s15 = int_to_ptr.vmem [resolvable:$true] %s14
      %17 = dma.hbm_to_vmem [thread:$0]  %s0, 2048, %s15, [#allocation3]
    $region5: #{tpu_custom_call.1} parent=1 // pred_fallthru
      _
    // Predicated region
    $region6: #{tpu_custom_call.1} parent=1 // pred_check
      _
    $region7: #{tpu_custom_call.1} parent=1 // pred_check_branch
      %19 = sbr.rel (0) target = $region9
    $region8: #{tpu_custom_call.1} parent=1 // pred_region
      %20 = dma.done [#allocation3], 2048
    $region9: #{tpu_custom_call.1} parent=1 // pred_fallthru
      _
    %v21 = vld [vmem:[#allocation2] sm:$0xff]
    %v22 = vld [vmem:[#allocation2 + $0x8] sm:$0xff]
    %v23 = vld [vmem:[#allocation2 + $0x10] sm:$0xff]
    %v24 = vld [vmem:[#allocation2 + $0x18] sm:$0xff]
    %v25 = vld [vmem:[#allocation2 + $0x20] sm:$0xff]
    %v26 = vld [vmem:[#allocation2 + $0x28] sm:$0xff]
    %v27 = vld [vmem:[#allocation2 + $0x30] sm:$0xff]
    %v28 = vld [vmem:[#allocation2 + $0x38] sm:$0xff]
    %v29 = vld [vmem:[#allocation2 + $0x40] sm:$0xff]
    %v30 = vld [vmem:[#allocation2 + $0x48] sm:$0xff]
    %v31 = vld [vmem:[#allocation2 + $0x50] sm:$0xff]
    %v32 = vld [vmem:[#allocation2 + $0x58] sm:$0xff]
    %v33 = vld [vmem:[#allocation2 + $0x60] sm:$0xff]
    %v34 = vld [vmem:[#allocation2 + $0x68] sm:$0xff]
    %v35 = vld [vmem:[#allocation2 + $0x70] sm:$0xff]
    %v36 = vld [vmem:[#allocation2 + $0x78] sm:$0xff]
    %37 = vst [vmem:[#allocation5] sm:$0xff] %v21
    %38 = vst [vmem:[#allocation5 + $0x8] sm:$0xff] %v22
    %39 = vst [vmem:[#allocation5 + $0x10] sm:$0xff] %v23
    %40 = vst [vmem:[#allocation5 + $0x18] sm:$0xff] %v24
    %41 = vst [vmem:[#allocation5 + $0x20] sm:$0xff] %v25
    %42 = vst [vmem:[#allocation5 + $0x28] sm:$0xff] %v26
    %43 = vst [vmem:[#allocation5 + $0x30] sm:$0xff] %v27
    %44 = vst [vmem:[#allocation5 + $0x38] sm:$0xff] %v28
    %45 = vst [vmem:[#allocation5 + $0x40] sm:$0xff] %v29
    %46 = vst [vmem:[#allocation5 + $0x48] sm:$0xff] %v30
    %47 = vst [vmem:[#allocation5 + $0x50] sm:$0xff] %v31
    %48 = vst [vmem:[#allocation5 + $0x58] sm:$0xff] %v32
    %49 = vst [vmem:[#allocation5 + $0x60] sm:$0xff] %v33
    %50 = vst [vmem:[#allocation5 + $0x68] sm:$0xff] %v34
    %51 = vst [vmem:[#allocation5 + $0x70] sm:$0xff] %v35
    %52 = vst [vmem:[#allocation5 + $0x78] sm:$0xff] %v36
    // Predicated region
    $region10: #{tpu_custom_call.1} parent=1 // pred_check
      _
    $region11: #{tpu_custom_call.1} parent=1 // pred_check_branch
      %54 = sbr.rel (0) target = $region13
    $region12: #{tpu_custom_call.1} parent=1 // pred_region
      %s56 = ssub.s32 2048, 2048
      %57 = vsyncadd [#allocation4], %s56
      %s59 = sshll.u32 [#allocation5], 4
      %s60 = int_to_ptr.vmem [resolvable:$true] %s59
      %62 = dma.vmem_to_hbm [thread:$0]  %s60, 2048, %s1, [#allocation4]
    $region13: #{tpu_custom_call.1} parent=1 // pred_fallthru
      _
    // Predicated region
    $region14: #{tpu_custom_call.1} parent=1 // pred_check
      _
    $region15: #{tpu_custom_call.1} parent=1 // pred_check_branch
      %64 = sbr.rel (0) target = $region17
    $region16: #{tpu_custom_call.1} parent=1 // pred_region
      %65 = dma.done [#allocation4], 2048
    $region17: #{tpu_custom_call.1} parent=1 // pred_fallthru
      _
    %66 = vsyncpa [#allocation3], 1
    %67 = vsyncpa [#allocation4], 1

</llo_original>
